<compile_context>
chip_gen: v7x
topology: tpu7x:2x2x1
jax: 0.10.0
libtpu: 0.0.40
codegen_flags: <defaults>
</compile_context>

<pallas_src>
import math
import functools

import jax
import jax.numpy as jnp
from jax import lax
from jax.experimental import pallas as pl
from jax.experimental.pallas import tpu as pltpu


# --------------------------------------------------------------------------
# helpers
# --------------------------------------------------------------------------
def _round_up(x, m):
    return ((x + m - 1) // m) * m


def _has_fast_bf16_valu():
    """v6e / v7x have a bf16 VALU; older chips do the scale in f32."""
    try:
        kind = jax.devices()[0].device_kind.lower()
    except Exception:
        return False
    return ("v6" in kind) or ("v7" in kind)


def _choose_token_tile(n_tokens, embed, itemsize, requested=256):
    """Pick T: multiple of 16 (bf16 sublane packing), large enough to amortize
    per-step overhead, small enough that the double-buffered (T, E) in/out
    tiles + f32 temp stay well inside v7x's 64 MiB VMEM."""
    pack = 16
    budget = 8 * 1024 * 1024                     # per-tile working-set target
    per_token = embed * (2 * itemsize + 4) + 8   # rows + out + f32 temp, rough
    cap = max(pack, budget // max(per_token, 1))
    t = min(requested, cap, _round_up(n_tokens, pack))
    return max(pack, (t // pack) * pack)


# --------------------------------------------------------------------------
# Path A: small vocab -> weight table resident in VMEM, gather via one-hot MXU
# --------------------------------------------------------------------------
def _onehot_gather_kernel(ids_ref, w_ref, out_ref, *, scale, vocab):
    # ids_ref: (T, 1) int32   w_ref: (V, E) full table   out_ref: (T, E)
    ids = jnp.clip(ids_ref[...], 0, vocab - 1)                      # (T, 1)
    iota = lax.broadcasted_iota(jnp.int32, (ids.shape[0], vocab), 1)
    one_hot = (ids == iota).astype(w_ref.dtype)                     # (T, V)
    acc = jnp.dot(one_hot, w_ref[...],
                  preferred_element_type=jnp.float32)               # MXU
    out_ref[...] = (acc * scale).astype(out_ref.dtype)


def _embedding_table_resident(ids_flat, weight, T, num_tiles, scale):
    n_pad = ids_flat.shape[0]
    V, E = weight.shape
    itemsize = weight.dtype.itemsize
    ids_2d = ids_flat.reshape(n_pad, 1)

    vmem_est = (2 * V * E * itemsize          # resident table (pipelined bufs)
                + 2 * T * E * itemsize        # output tiles
                + T * V * 4 + T * E * 4       # one-hot + f32 acc temps
                + 2 * T * 512)                # ids tiles (padded)
    vmem_limit = int(min(max(2 * vmem_est, 32 << 20), 48 << 20))

    grid_spec = pltpu.PrefetchScalarGridSpec(
        num_scalar_prefetch=0,
        grid=(num_tiles,),
        in_specs=[
            pl.BlockSpec((T, 1), lambda i: (i, 0)),     # ids tile
            pl.BlockSpec((V, E), lambda i: (0, 0)),     # full table, loaded once
        ],
        out_specs=pl.BlockSpec((T, E), lambda i: (i, 0)),
    )
    return pl.pallas_call(
        functools.partial(_onehot_gather_kernel, scale=scale, vocab=V),
        grid_spec=grid_spec,
        out_shape=jax.ShapeDtypeStruct((n_pad, E), weight.dtype),
        compiler_params=pltpu.CompilerParams(
            dimension_semantics=("parallel",),
            vmem_limit_bytes=vmem_limit),
    )(ids_2d, weight)


# --------------------------------------------------------------------------
# Path B: large vocab -> weight stays in HBM, batch T row-DMAs per grid step
# --------------------------------------------------------------------------
def _hbm_row_gather_kernel(ids_smem, w_hbm, out_ref, rows, sem, *,
                           scale, tokens_per_tile, vocab, compute_dtype):
    # ids_smem: (N_pad,) int32 in SMEM (scalar prefetch)
    # w_hbm:    (V, E) weight left in HBM (memory_space=pl.ANY)
    # out_ref:  (T, E) output block
    # rows:     VMEM scratch (T, E); sem: single DMA semaphore (shared)
    t = pl.program_id(0)
    base = t * tokens_per_tile

    # Issue all T row gathers up-front (all in flight at once).
    @pl.loop(0, tokens_per_tile)
    def _issue(i):
        idx = jnp.clip(ids_smem[base + i], 0, vocab - 1)
        pltpu.make_async_copy(w_hbm.at[pl.ds(idx, 1), :],
                              rows.at[pl.ds(i, 1), :],
                              sem.at[0]).start()

    # Wait for all of them (equal-sized copies sharing one semaphore).
    @pl.loop(0, tokens_per_tile)
    def _wait(i):
        pltpu.make_async_copy(w_hbm.at[pl.ds(0, 1), :],
                              rows.at[pl.ds(i, 1), :],
                              sem.at[0]).wait()

    gathered = rows[...].astype(compute_dtype) * jnp.asarray(scale, compute_dtype)
    out_ref[...] = gathered.astype(out_ref.dtype)


def _embedding_hbm_gather(ids_flat, weight, T, num_tiles, scale):
    n_pad = ids_flat.shape[0]
    V, E = weight.shape
    itemsize = weight.dtype.itemsize

    compute_dtype = (jnp.bfloat16
                     if (weight.dtype == jnp.bfloat16 and _has_fast_bf16_valu())
                     else jnp.float32)

    vmem_est = 3 * T * E * itemsize + T * E * 4
    vmem_limit = int(min(max(2 * vmem_est, 32 << 20), 48 << 20))

    grid_spec = pltpu.PrefetchScalarGridSpec(
        num_scalar_prefetch=1,                          # ids -> SMEM
        grid=(num_tiles,),
        in_specs=[pl.BlockSpec(memory_space=pl.ANY)],   # weight stays in HBM
        out_specs=pl.BlockSpec((T, E), lambda i, ids_sref: (i, 0)),
        scratch_shapes=[pltpu.VMEM((T, E), weight.dtype),
                        pltpu.SemaphoreType.DMA((1,))],
    )
    return pl.pallas_call(
        functools.partial(_hbm_row_gather_kernel, scale=scale,
                          tokens_per_tile=T, vocab=V,
                          compute_dtype=compute_dtype),
        grid_spec=grid_spec,
        out_shape=jax.ShapeDtypeStruct((n_pad, E), weight.dtype),
        compiler_params=pltpu.CompilerParams(
            dimension_semantics=("parallel",),
            vmem_limit_bytes=vmem_limit),
    )(ids_flat, weight)


# --------------------------------------------------------------------------
# wrapper == Embedding.forward
# --------------------------------------------------------------------------
def embedding_forward(ids, weight, *, token_tile=256, force_path=None):
    """Equivalent of F.embedding(ids, weight) / sqrt(embedding_size)."""
    B, S = ids.shape
    V, E = weight.shape
    N = B * S
    scale = 1.0 / math.sqrt(E)
    itemsize = weight.dtype.itemsize

    T = _choose_token_tile(N, E, itemsize, requested=token_tile)
    num_tiles = -(-N // T)
    n_pad = num_tiles * T

    ids_flat = ids.reshape(N).astype(jnp.int32)
    if n_pad != N:
        ids_flat = jnp.pad(ids_flat, (0, n_pad - N))   # pad tokens gather row 0

    # Small table (fits comfortably in VMEM on every generation incl. v7x's
    # 64 MiB) -> resident-table path; otherwise HBM row-gather path.
    use_table = (V <= 2048) and (V * E * itemsize <= 16 * 1024 * 1024)
    if force_path == "dma":
        use_table = False
    elif force_path == "table":
        use_table = True

    if use_table:
        out_flat = _embedding_table_resident(ids_flat, weight, T, num_tiles, scale)
    else:
        out_flat = _embedding_hbm_gather(ids_flat, weight, T, num_tiles, scale)

    return out_flat[:N].reshape(B, S, E)


# --------------------------------------------------------------------------
# demo / self-check
# --------------------------------------------------------------------------
if __name__ == "__main__":
    vocab_size, embedding_size = 64, 128
    batch, seq = 2, 8

    key = jax.random.PRNGKey(0)
    k_w, k_ids = jax.random.split(key)

    # torch.half -> bfloat16 on TPU; init ~ normal(0, 1).
    weight = jax.random.normal(
        k_w, (vocab_size, embedding_size), jnp.float32).astype(jnp.bfloat16)
    ids = jax.random.randint(k_ids, (batch, seq), 0, vocab_size, jnp.int32)

    # Pure-JAX reference.
    ref = (jnp.take(weight, ids.reshape(-1), axis=0).astype(jnp.float32)
           / math.sqrt(embedding_size)).reshape(batch, seq, embedding_size)

    # Path A (auto-selected for this small vocab: VMEM-resident table).
    out_table = jax.block_until_ready(embedding_forward(ids, weight))
    # Path B (forced: HBM row-gather with batched per-tile DMAs).
    out_dma = jax.block_until_ready(embedding_forward(ids, weight,
                                                      force_path="dma"))

    for out in (out_table, out_dma):
        assert out.shape == (batch, seq, embedding_size)
        assert out.dtype == jnp.bfloat16
        assert jnp.allclose(out.astype(jnp.float32), ref, atol=1e-2, rtol=1e-2)

    print("KERNEL_OK")
</pallas_src>

<mosaic_0001>
module attributes {stable_mosaic.version = 11 : i64} {
  func.func @_onehot_gather_kernel(%arg0: i32, %arg1: memref<16x1xi32, #tpu.memory_space<vmem>>, %arg2: memref<64x128xbf16, #tpu.memory_space<vmem>>, %arg3: memref<16x128xbf16, #tpu.memory_space<vmem>>) attributes {dimension_semantics = [#tpu.dimension_semantics<parallel>], iteration_bounds = array<i64: 1>, scalar_prefetch = 0 : i64, scratch_operands = 0 : i64, tpu.core_type = #tpu.core_type<tc>, window_params = [{transform_indices = @transform_0, window_bounds = array<i64: 16, 1>}, {pipeline_mode = #tpu.pipeline_mode<synchronous>, transform_indices = @transform_1, window_bounds = array<i64: 64, 128>}, {transform_indices = @transform_2, window_bounds = array<i64: 16, 128>}]} {
    %c0 = arith.constant 0 : index
    %c0_0 = arith.constant 0 : index
    %0 = vector.load %arg1[%c0, %c0_0] : memref<16x1xi32, #tpu.memory_space<vmem>>, vector<16x1xi32>
    %c0_i32 = arith.constant 0 : i32
    %c63_i32 = arith.constant 63 : i32
    %1 = vector.broadcast %c0_i32 : i32 to vector<16x1xi32>
    %2 = arith.maxsi %1, %0 : vector<16x1xi32>
    %3 = vector.broadcast %c63_i32 : i32 to vector<16x1xi32>
    %4 = arith.minsi %3, %2 : vector<16x1xi32>
    %5 = tpu.iota {dimensions = array<i32: 1>} : vector<16x64xi32>
    %6 = vector.broadcast %4 : vector<16x1xi32> to vector<16x64xi32>
    %7 = arith.cmpi eq, %6, %5 : vector<16x64xi32>
    %8 = arith.extui %7 : vector<16x64xi1> to vector<16x64xi32>
    %9 = arith.sitofp %8 : vector<16x64xi32> to vector<16x64xf32>
    %10 = arith.truncf %9 : vector<16x64xf32> to vector<16x64xbf16>
    %c0_1 = arith.constant 0 : index
    %c0_2 = arith.constant 0 : index
    %11 = vector.load %arg2[%c0_1, %c0_2] : memref<64x128xbf16, #tpu.memory_space<vmem>>, vector<64x128xbf16>
    %cst = arith.constant dense<0.000000e+00> : vector<16x128xf32>
    %12 = tpu.matmul %10, %11, %cst {dimension_numbers = #tpu.dot_dimension_numbers<[1], [0], [0], [1], [0, 0, 1, 1], [], []>} : vector<16x64xbf16>, vector<64x128xbf16>, vector<16x128xf32> -> vector<16x128xf32>
    %cst_3 = arith.constant 0.0883883461 : f32
    %13 = vector.broadcast %cst_3 : f32 to vector<16x128xf32>
    %14 = arith.mulf %12, %13 : vector<16x128xf32>
    %15 = arith.truncf %14 : vector<16x128xf32> to vector<16x128xbf16>
    %c0_4 = arith.constant 0 : index
    %c0_5 = arith.constant 0 : index
    %16 = vector.load %arg3[%c0_4, %c0_5] : memref<16x128xbf16, #tpu.memory_space<vmem>>, vector<16x128xbf16>
    tpu.vector_store %arg3[%c0_4, %c0_5], %15 {strides = array<i32>} : memref<16x128xbf16, #tpu.memory_space<vmem>>, vector<16x128xbf16>,
    return
  }
  func.func @transform_0(%arg0: i32) -> (i32, i32) {
    %c0_i32 = arith.constant 0 : i32
    %c0_i32_0 = arith.constant 0 : i32
    return %arg0, %c0_i32 : i32, i32
  }
  func.func @transform_1(%arg0: i32) -> (i32, i32) {
    %c0_i32 = arith.constant 0 : i32
    %c0_i32_0 = arith.constant 0 : i32
    %c0_i32_1 = arith.constant 0 : i32
    return %c0_i32, %c0_i32_0 : i32, i32
  }
  func.func @transform_2(%arg0: i32) -> (i32, i32) {
    %c0_i32 = arith.constant 0 : i32
    %c0_i32_0 = arith.constant 0 : i32
    return %arg0, %c0_i32 : i32, i32
  }
}

</mosaic_0001>

<llo_original>
// kernel: tpu_custom_call.1
$region0: #{tpu_custom_call.1}
  #allocation0 [shape = 'u32[]', space=smem, size = 0x4, offset = 0x4, fixed_abs, tag = 'smem constant byte address 0x4 - core index']
  #allocation1 [shape = 'u32[144,128]{1,0:T(1,128)}', space=vmem, size = 0x12000, scoped, tag = 'internal scratch']
  %s0 = inlined_call_operand.vmem [shape: s32[16,1], index: 0, kind: input, shape index: {}]
  %s1 = inlined_call_operand.hbm [shape: bf16[64,128], index: 1, kind: input, shape index: {}]
  %s2 = inlined_call_operand.hbm [shape: bf16[16,128], index: 2, kind: output, shape index: {}]
  %s3 = sld [smem:[#allocation0]]
  $region22: #{tpu_custom_call.1} parent=0
    _
  %s5 = ssub.s32 1, %s3
  %s6 = scalar_select 0, %s5, %s3
  $region1: #{tpu_custom_call.1} parent=0
    #allocation2 [shape = 'u8[16384]{0}', space=vmem, size = 0x4000, scoped, tag = 'input window, operand 1, single buffered']
    #allocation3 [shape = 's32[1]{0}', space=sflag, size = 0x4, scoped, tag = 'scoped memory for tpu_custom_call.1']
    #allocation4 [shape = 's32[1]{0}', space=sflag, size = 0x4, scoped, tag = 'scoped memory for tpu_custom_call.1']
    #allocation5 [shape = 'u8[4096]{0}', space=vmem, size = 0x1000, scoped, tag = 'output window, operand 0, single buffered']
    %7 = vsyncpa [#allocation3], 0
    %8 = vsyncpa [#allocation4], 0
    // Predicated region
    $region2: #{tpu_custom_call.1} parent=1 // pred_check
      _
    $region3: #{tpu_custom_call.1} parent=1 // pred_check_branch
      %10 = sbr.rel (0) target = $region5
    $region4: #{tpu_custom_call.1} parent=1 // pred_region
      _
    $region5: #{tpu_custom_call.1} parent=1 // pred_fallthru
      _
    // Predicated region
    $region6: #{tpu_custom_call.1} parent=1 // pred_check
      _
    $region7: #{tpu_custom_call.1} parent=1 // pred_check_branch
      %12 = sbr.rel (0) target = $region9
    $region8: #{tpu_custom_call.1} parent=1 // pred_region
      %s14 = ssub.s32 512, 512
      %15 = vsyncadd [#allocation3], %s14
      %s16 = sshll.u32 [#allocation2], 4
      %s17 = int_to_ptr.vmem [resolvable:$true] %s16
      %22 = dma.hbm_to_vmem [thread:$0]  %s1, 512, %s17, [#allocation3], 64, 64, 4
    $region9: #{tpu_custom_call.1} parent=1 // pred_fallthru
      _
    // Predicated region
    $region10: #{tpu_custom_call.1} parent=1 // pred_check
      _
    $region11: #{tpu_custom_call.1} parent=1 // pred_check_branch
      %24 = sbr.rel (0) target = $region13
    $region12: #{tpu_custom_call.1} parent=1 // pred_region
      %25 = dma.done [#allocation3], 512
    $region13: #{tpu_custom_call.1} parent=1 // pred_fallthru
      _
    %v27 = vld [vmem:[%s0] sm:$0xff]
    %v28 = vld [vmem:[%s0 + $0x8] sm:$0xff]
    %vm29 = vcmp.gt.s32.totalorder %v27, 0
    %v30 = vsel %vm29, %v27, 0
    %vm31 = vcmp.gt.s32.totalorder %v28, 0
    %v32 = vsel %vm31, %v28, 0
    %vm33 = vcmp.lt.s32.totalorder %v30, 63
    %v34 = vsel %vm33, %v30, 63
    %vm35 = vcmp.lt.s32.totalorder %v32, 63
    %v36 = vsel %vm35, %v32, 63
    %v37 = vlaneseq
    %v38 = vand.u32 %v37, 127
    %39 = vset.pattern.permute.xlu0 0
    %40 = vperm.xlu0 %39, %v34
    %v41 = vpop.permute.xlu0 %40
    %42 = vset.pattern.permute.xlu0 0
    %43 = vperm.xlu0 %42, %v36
    %v44 = vpop.permute.xlu0 %43
    %vm45 = vcmp.eq.s32.totalorder %v41, %v38
    %vm46 = vcmp.eq.s32.totalorder %v44, %v38
    %v47 = vsel %vm45, 1, 0
    %v48 = vsel %vm46, 1, 0
    %v49 = vcvt.s32.f32 %v47
    %v50 = vcvt.s32.f32 %v48
    %v51 = vpack.c.bf16 %v50, %v49
    %v52 = vld [vmem:[#allocation2] sm:$0xf]
    %v53 = vld [vmem:[#allocation2 + $0x4] sm:$0xf]
    %v54 = vld [vmem:[#allocation2 + $0x8] sm:$0xf]
    %v55 = vld [vmem:[#allocation2 + $0xc] sm:$0xf]
    %v56 = vld [vmem:[#allocation2 + $0x10] sm:$0xf]
    %v57 = vld [vmem:[#allocation2 + $0x14] sm:$0xf]
    %v58 = vld [vmem:[#allocation2 + $0x18] sm:$0xf]
    %v59 = vld [vmem:[#allocation2 + $0x1c] sm:$0xf]
    %v68 = vunpack.c.l.b16 %v52
    %v69 = vunpack.c.l.b16 %v53
    %v70 = vunpack.c.l.b16 %v54
    %v71 = vunpack.c.l.b16 %v55
    %v72 = vunpack.c.l.b16 %v56
    %v73 = vunpack.c.l.b16 %v57
    %v74 = vunpack.c.l.b16 %v58
    %v75 = vunpack.c.l.b16 %v59
    %v76 = vpack.c.b16 %v69, %v68
    %v77 = vpack.c.b16 %v71, %v70
    %v78 = vpack.c.b16 %v73, %v72
    %v79 = vpack.c.b16 %v75, %v74
    %vm84 = vcmask 523264
    %v86 = vsel %vm84, %v51, 0
    %88 = vmatprep.subr.bf16.mxu0 0
    %89 = vmatpush1.bf16.msra.mxu0 %v76
    %90 = vmatprep.subr.bf16.mxu0 0
    %91 = vmatpush1.bf16.msra.mxu0 %v77
    %92 = vmatprep.subr.bf16.mxu0 0
    %93 = vmatpush1.bf16.msra.mxu0 %v78
    %94 = vmatprep.subr.bf16.mxu0 0
    %95 = vmatpush1.bf16.msra.mxu0 %v79
    %96 = vmatprep.subr.bf16.mxu0 0
    %97 = vmatpush1.bf16.msra.mxu0 0
    %98 = vmatprep.subr.bf16.mxu0 0
    %99 = vmatpush1.bf16.msra.mxu0 0
    %100 = vmatprep.subr.bf16.mxu0 0
    %101 = vmatpush1.bf16.msra.mxu0 0
    %102 = vmatprep.subr.bf16.mxu0 0
    %103 = vmatpush1.bf16.msra.mxu0 0
    %104 = vmatprep.subr.bf16.mxu0 0
    %105 = vmatpush1.bf16.msra.mxu0 0
    %106 = vmatprep.subr.bf16.mxu0 0
    %107 = vmatpush1.bf16.msra.mxu0 0
    %108 = vmatprep.subr.bf16.mxu0 0
    %109 = vmatpush1.bf16.msra.mxu0 0
    %110 = vmatprep.subr.bf16.mxu0 0
    %111 = vmatpush1.bf16.msra.mxu0 0
    %112 = vmatprep.subr.bf16.mxu0 0
    %113 = vmatpush1.bf16.msra.mxu0 0
    %114 = vmatprep.subr.bf16.mxu0 0
    %115 = vmatpush1.bf16.msra.mxu0 0
    %116 = vmatprep.subr.bf16.mxu0 0
    %117 = vmatpush1.bf16.msra.mxu0 0
    %118 = vmatprep.subr.bf16.mxu0 0
    %119 = vmatpush1.bf16.msra.mxu0 0
    %120 = vmatprep.mubr.bf16.mxu0 0
    %121 = vmatmul.mubr.bf16.gmra.mrb[0].mxu0 %v86
    %v122 = vpop.f32.mrb[0].mxu0
    %v123 = vadd.f32 0.0, %v122
    %v124 = vpop.f32.mrb[0].mxu0
    %v125 = vpop.f32.mrb[0].mxu0
    %v126 = vadd.f32 0.0, %v125
    %v127 = vpop.f32.mrb[0].mxu0
    %128 = vdwg.mxu0
    %v129 = vmul.f32 %v123, 0.088388346
    %v130 = vmul.f32 %v126, 0.088388346
    %v131 = vpack.c.bf16 %v130, %v129
    %v133 = vunpack.c.l.b16 %v131
    %v134 = vunpack.c.h.b16 %v131
    %v135 = vpack.c.b16 %v133, %v133
    %v136 = vpack.c.b16 %v134, %v134
    %139 = vst [vmem:[#allocation5] sm:$0xf] %v135
    %140 = vst [vmem:[#allocation5 + $0x4] sm:$0xf] %v136
    // Predicated region
    $region14: #{tpu_custom_call.1} parent=1 // pred_check
      _
    $region15: #{tpu_custom_call.1} parent=1 // pred_check_branch
      %142 = sbr.rel (0) target = $region17
    $region16: #{tpu_custom_call.1} parent=1 // pred_region
      %s144 = ssub.s32 128, 128
      %145 = vsyncadd [#allocation4], %s144
      %s146 = sshll.u32 [#allocation5], 4
      %s147 = int_to_ptr.vmem [resolvable:$true] %s146
      %152 = dma.vmem_to_hbm [thread:$0]  %s147, 128, %s2, [#allocation4], 64, 64, 4
    $region17: #{tpu_custom_call.1} parent=1 // pred_fallthru
      _
    // Predicated region
    $region18: #{tpu_custom_call.1} parent=1 // pred_check
      _
    $region19: #{tpu_custom_call.1} parent=1 // pred_check_branch
      %154 = sbr.rel (0) target = $region21
    $region20: #{tpu_custom_call.1} parent=1 // pred_region
      %155 = dma.done [#allocation4], 128
    $region21: #{tpu_custom_call.1} parent=1 // pred_fallthru
      _
    %156 = vsyncpa [#allocation3], 1
    %157 = vsyncpa [#allocation4], 1

</llo_original>
